<compile_context>
chip_gen: v5e
topology: v5e:2x2
jax: 0.10.0
libtpu: 0.0.40
codegen_flags: <defaults>
</compile_context>

<pallas_src>
import functools

import jax
import jax.numpy as jnp
from jax.experimental import pallas as pl
from jax.experimental.pallas import tpu as pltpu


LANE = 128          # vreg lane width
DEFAULT_TILE_ROWS = 512   # 512 x 128 x 4B = 256 KiB per buffer (~85% HBM roofline)


def _round_up(v, m):
    return ((v + m - 1) // m) * m


def _gaussian_vae_kernel(x_ref, noise_ref, y_ref, kl_ref):
    """Per-tile: y = x + noise; emit partial sum(x^2) broadcast into (8,128)."""
    x = x_ref[...]
    y_ref[...] = x + noise_ref[...]
    part = jnp.sum(x * x)
    kl_ref[...] = jnp.full(kl_ref.shape, part, dtype=kl_ref.dtype)


def gaussian_vae_forward(source_embed, noise_key, vae_wt=0.5, add_noise=True,
                         tile_rows=DEFAULT_TILE_ROWS):
    """JAX wrapper mirroring GaussianVAEWrapper.forward."""
    if not add_noise:
        return source_embed, jnp.float32(0.0)

    batch, agenda_dim = source_embed.shape
    orig_dtype = source_embed.dtype

    # Standard-normal noise (torch.normal(means=0, std=1) equivalent).
    noise = jax.random.normal(noise_key, (batch, agenda_dim), dtype=jnp.float32)

    # ---- lane-dense repack: (batch, agenda_dim) -> zero-padded (rows, 128) ----
    total = batch * agenda_dim
    rows = pl.cdiv(total, LANE)
    tb = min(tile_rows, _round_up(rows, 8))          # sublane-aligned tile
    padded_rows = pl.cdiv(rows, tb) * tb
    grid = padded_rows // tb
    padded_total = padded_rows * LANE

    x_flat = source_embed.reshape(-1).astype(jnp.float32)
    n_flat = noise.reshape(-1)
    pad = padded_total - total
    x2d = jnp.pad(x_flat, (0, pad)).reshape(padded_rows, LANE)
    n2d = jnp.pad(n_flat, (0, pad)).reshape(padded_rows, LANE)

    noisy2d, kl_parts = pl.pallas_call(
        _gaussian_vae_kernel,
        out_shape=(
            jax.ShapeDtypeStruct((padded_rows, LANE), jnp.float32),   # x + noise
            jax.ShapeDtypeStruct((grid * 8, LANE), jnp.float32),      # KL partials
        ),
        grid=(grid,),
        in_specs=[
            pl.BlockSpec((tb, LANE), lambda i: (i, 0)),
            pl.BlockSpec((tb, LANE), lambda i: (i, 0)),
        ],
        out_specs=(
            pl.BlockSpec((tb, LANE), lambda i: (i, 0)),
            pl.BlockSpec((8, LANE), lambda i: (i, 0)),
        ),
        compiler_params=pltpu.CompilerParams(
            dimension_semantics=("parallel",),        # no carried state across tiles
            vmem_limit_bytes=32 * 1024 * 1024,
        ),
    )(x2d, n2d)

    noisy = (noisy2d.reshape(-1)[:total]
             .reshape(batch, agenda_dim)
             .astype(orig_dtype))
    # One representative element per (8,128) partial block (all lanes identical).
    kl = (float(vae_wt) * 0.5 / float(batch)) * jnp.sum(kl_parts[::8, 0])
    return noisy, kl


if __name__ == "__main__":
    key = jax.random.PRNGKey(0)
    key_x, key_noise = jax.random.split(key)
    batch, agenda_dim = 2, 32
    vae_wt = 0.5

    source_embed = jax.random.normal(key_x, (batch, agenda_dim), dtype=jnp.float32)

    noisy, kl = gaussian_vae_forward(source_embed, key_noise,
                                     vae_wt=vae_wt, add_noise=True)
    noisy = jax.block_until_ready(noisy)
    kl = jax.block_until_ready(kl)

    # --- reference checks ---
    kl_ref = vae_wt * 0.5 * jnp.sum(source_embed ** 2) / batch
    assert jnp.allclose(kl, kl_ref, rtol=1e-5, atol=1e-6), (kl, kl_ref)

    expected_noise = jax.random.normal(key_noise, (batch, agenda_dim),
                                       dtype=jnp.float32)
    assert jnp.allclose(noisy - source_embed, expected_noise,
                        rtol=1e-5, atol=1e-6)
    assert noisy.shape == source_embed.shape and noisy.dtype == source_embed.dtype

    # add_noise=False path (pure passthrough, no kernel).
    out_nn, kl_nn = gaussian_vae_forward(source_embed, key_noise,
                                         vae_wt=vae_wt, add_noise=False)
    assert jnp.array_equal(out_nn, source_embed) and float(kl_nn) == 0.0

    print("KERNEL_OK")
</pallas_src>

<mosaic_0001>
module attributes {stable_mosaic.version = 11 : i64} {
  func.func @_gaussian_vae_kernel(%arg0: i32, %arg1: memref<8x128xf32, #tpu.memory_space<vmem>>, %arg2: memref<8x128xf32, #tpu.memory_space<vmem>>, %arg3: memref<8x128xf32, #tpu.memory_space<vmem>>, %arg4: memref<8x128xf32, #tpu.memory_space<vmem>>) attributes {dimension_semantics = [#tpu.dimension_semantics<parallel>], iteration_bounds = array<i64: 1>, scalar_prefetch = 0 : i64, scratch_operands = 0 : i64, tpu.core_type = #tpu.core_type<tc>, window_params = [{transform_indices = @transform_0, window_bounds = array<i64: 8, 128>}, {transform_indices = @transform_1, window_bounds = array<i64: 8, 128>}, {transform_indices = @transform_2, window_bounds = array<i64: 8, 128>}, {transform_indices = @transform_3, window_bounds = array<i64: 8, 128>}]} {
    %c0 = arith.constant 0 : index
    %c0_0 = arith.constant 0 : index
    %0 = vector.load %arg1[%c0, %c0_0] : memref<8x128xf32, #tpu.memory_space<vmem>>, vector<8x128xf32>
    %c0_1 = arith.constant 0 : index
    %c0_2 = arith.constant 0 : index
    %1 = vector.load %arg2[%c0_1, %c0_2] : memref<8x128xf32, #tpu.memory_space<vmem>>, vector<8x128xf32>
    %2 = arith.addf %0, %1 : vector<8x128xf32>
    %c0_3 = arith.constant 0 : index
    %c0_4 = arith.constant 0 : index
    %3 = vector.load %arg3[%c0_3, %c0_4] : memref<8x128xf32, #tpu.memory_space<vmem>>, vector<8x128xf32>
    tpu.vector_store %arg3[%c0_3, %c0_4], %2 {strides = array<i32>} : memref<8x128xf32, #tpu.memory_space<vmem>>, vector<8x128xf32>,
    %4 = arith.mulf %0, %0 : vector<8x128xf32>
    %5 = vector.shape_cast %4 : vector<8x128xf32> to vector<1x8x128xf32>
    %cst = arith.constant dense<0.000000e+00> : vector<1xf32>
    %6 = vector.multi_reduction <add>, %5, %cst [1, 2] : vector<1x8x128xf32> to vector<1xf32>
    %7 = vector.shape_cast %6 : vector<1xf32> to vector<1x1x1xf32>
    %8 = vector.extract %7[0, 0, 0] : f32 from vector<1x1x1xf32>
    %9 = vector.broadcast %8 : f32 to vector<8x128xf32>
    %c0_5 = arith.constant 0 : index
    %c0_6 = arith.constant 0 : index
    %10 = vector.load %arg4[%c0_5, %c0_6] : memref<8x128xf32, #tpu.memory_space<vmem>>, vector<8x128xf32>
    tpu.vector_store %arg4[%c0_5, %c0_6], %9 {strides = array<i32>} : memref<8x128xf32, #tpu.memory_space<vmem>>, vector<8x128xf32>,
    return
  }
  func.func @transform_0(%arg0: i32) -> (i32, i32) {
    %c0_i32 = arith.constant 0 : i32
    %c0_i32_0 = arith.constant 0 : i32
    return %arg0, %c0_i32 : i32, i32
  }
  func.func @transform_1(%arg0: i32) -> (i32, i32) {
    %c0_i32 = arith.constant 0 : i32
    %c0_i32_0 = arith.constant 0 : i32
    return %arg0, %c0_i32 : i32, i32
  }
  func.func @transform_2(%arg0: i32) -> (i32, i32) {
    %c0_i32 = arith.constant 0 : i32
    %c0_i32_0 = arith.constant 0 : i32
    return %arg0, %c0_i32 : i32, i32
  }
  func.func @transform_3(%arg0: i32) -> (i32, i32) {
    %c0_i32 = arith.constant 0 : i32
    %c0_i32_0 = arith.constant 0 : i32
    return %arg0, %c0_i32 : i32, i32
  }
}

</mosaic_0001>

<llo_original>
// kernel: tpu_custom_call.1
$region0: #{tpu_custom_call.1}
  #allocation0 [shape = 'u32[]', space=smem, size = 0x4, offset = 0x4, fixed_abs, tag = 'smem constant byte address 0x4 - core index']
  #allocation1 [shape = 'u32[72,128]{1,0:T(1,128)}', space=vmem, size = 0x9000, scoped, tag = 'internal scratch']
  %s0 = inlined_call_operand.hbm [shape: f32[8,128], index: 0, kind: input, shape index: {}]
  %s1 = inlined_call_operand.hbm [shape: f32[8,128], index: 1, kind: input, shape index: {}]
  %s2 = inlined_call_operand.hbm [shape: f32[8,128], index: 2, kind: output, shape index: {0}]
  %s3 = inlined_call_operand.hbm [shape: f32[8,128], index: 3, kind: output, shape index: {1}]
  %4 = xla_tuple %s2, %s3
  %s5 = sld [smem:[#allocation0]]
  $region34: #{tpu_custom_call.1} parent=0
    _
  %s7 = ssub.s32 1, %s5
  %s8 = scalar_select 0, %s7, %s5
  $region1: #{tpu_custom_call.1} parent=0
    #allocation2 [shape = 'u8[4096]{0}', space=vmem, size = 0x1000, scoped, tag = 'input window, operand 0, single buffered']
    #allocation3 [shape = 's32[1]{0}', space=sflag, size = 0x4, scoped, tag = 'scoped memory for tpu_custom_call.1']
    #allocation4 [shape = 's32[1]{0}', space=sflag, size = 0x4, scoped, tag = 'scoped memory for tpu_custom_call.1']
    #allocation5 [shape = 'u8[4096]{0}', space=vmem, size = 0x1000, scoped, tag = 'input window, operand 1, single buffered']
    #allocation6 [shape = 's32[1]{0}', space=sflag, size = 0x4, scoped, tag = 'scoped memory for tpu_custom_call.1']
    #allocation7 [shape = 'u8[4096]{0}', space=vmem, size = 0x1000, scoped, tag = 'output window, operand 0, single buffered']
    #allocation8 [shape = 'u8[4096]{0}', space=vmem, size = 0x1000, scoped, tag = 'output window, operand 1, single buffered']
    #allocation9 [shape = 's32[1]{0}', space=sflag, size = 0x4, scoped, tag = 'scoped memory for tpu_custom_call.1']
    %9 = vsyncpa [#allocation3], 0
    %10 = vsyncpa [#allocation6], 0
    %11 = vsyncpa [#allocation4], 0
    %12 = vsyncpa [#allocation9], 0
    // Predicated region
    $region2: #{tpu_custom_call.1} parent=1 // pred_check
      _
    $region3: #{tpu_custom_call.1} parent=1 // pred_check_branch
      %14 = sbr.rel (0) target = $region5
    $region4: #{tpu_custom_call.1} parent=1 // pred_region
      %16 = vsyncadd [#allocation3], 0
      %s18 = sshll.u32 %s0, 4
      %s19 = int_to_ptr.hbm [resolvable:$true] %s18
      %s20 = sshll.u32 [#allocation2], 4
      %s21 = int_to_ptr.vmem [resolvable:$true] %s20
      %23 = dma.hbm_to_vmem [thread:$0]  %s19, 128, %s21, [#allocation3]
    $region5: #{tpu_custom_call.1} parent=1 // pred_fallthru
      _
    // Predicated region
    $region6: #{tpu_custom_call.1} parent=1 // pred_check
      _
    $region7: #{tpu_custom_call.1} parent=1 // pred_check_branch
      %25 = sbr.rel (0) target = $region9
    $region8: #{tpu_custom_call.1} parent=1 // pred_region
      %27 = vsyncadd [#allocation6], 0
      %s29 = sshll.u32 %s1, 4
      %s30 = int_to_ptr.hbm [resolvable:$true] %s29
      %s31 = sshll.u32 [#allocation5], 4
      %s32 = int_to_ptr.vmem [resolvable:$true] %s31
      %34 = dma.hbm_to_vmem [thread:$0]  %s30, 128, %s32, [#allocation6]
    $region9: #{tpu_custom_call.1} parent=1 // pred_fallthru
      _
    // Predicated region
    $region10: #{tpu_custom_call.1} parent=1 // pred_check
      _
    $region11: #{tpu_custom_call.1} parent=1 // pred_check_branch
      %36 = sbr.rel (0) target = $region13
    $region12: #{tpu_custom_call.1} parent=1 // pred_region
      %38 = dma.done [#allocation3], 128
    $region13: #{tpu_custom_call.1} parent=1 // pred_fallthru
      _
    // Predicated region
    $region14: #{tpu_custom_call.1} parent=1 // pred_check
      _
    $region15: #{tpu_custom_call.1} parent=1 // pred_check_branch
      %40 = sbr.rel (0) target = $region17
    $region16: #{tpu_custom_call.1} parent=1 // pred_region
      %42 = dma.done [#allocation6], 128
    $region17: #{tpu_custom_call.1} parent=1 // pred_fallthru
      _
    %v43 = vld [vmem:[#allocation2] sm:$0xff]
    %v44 = vld [vmem:[#allocation5] sm:$0xff]
    %v45 = vadd.f32 %v43, %v44
    %46 = vst [vmem:[#allocation7] sm:$0xff] %v45
    %v47 = vmul.f32 %v43, %v43
    %48 = vadd.xlane.f32.xlu0 %v47
    %v49 = vpop.xlane.xlu0 %48
    %v50 = vrot.slane %v49, 4
    %v51 = vadd.f32 %v49, %v50
    %v52 = vrot.slane %v51, 2
    %v53 = vadd.f32 %v51, %v52
    %v54 = vrot.slane %v53, 1
    %v55 = vadd.f32 %v53, %v54
    %s56 = vtos %v55
    %v57 = vstv %s56
    %58 = vst [vmem:[#allocation8] sm:$0xff] %v57
    // Predicated region
    $region18: #{tpu_custom_call.1} parent=1 // pred_check
      _
    $region19: #{tpu_custom_call.1} parent=1 // pred_check_branch
      %60 = sbr.rel (0) target = $region21
    $region20: #{tpu_custom_call.1} parent=1 // pred_region
      %62 = vsyncadd [#allocation4], 0
      %s64 = sshll.u32 [#allocation7], 4
      %s65 = int_to_ptr.vmem [resolvable:$true] %s64
      %s66 = sshll.u32 %s2, 4
      %s67 = int_to_ptr.hbm [resolvable:$true] %s66
      %69 = dma.vmem_to_hbm [thread:$0]  %s65, 128, %s67, [#allocation4]
    $region21: #{tpu_custom_call.1} parent=1 // pred_fallthru
      _
    // Predicated region
    $region22: #{tpu_custom_call.1} parent=1 // pred_check
      _
    $region23: #{tpu_custom_call.1} parent=1 // pred_check_branch
      %71 = sbr.rel (0) target = $region25
    $region24: #{tpu_custom_call.1} parent=1 // pred_region
      %73 = vsyncadd [#allocation9], 0
      %s75 = sshll.u32 [#allocation8], 4
      %s76 = int_to_ptr.vmem [resolvable:$true] %s75
      %s77 = sshll.u32 %s3, 4
      %s78 = int_to_ptr.hbm [resolvable:$true] %s77
      %80 = dma.vmem_to_hbm [thread:$0]  %s76, 128, %s78, [#allocation9]
    $region25: #{tpu_custom_call.1} parent=1 // pred_fallthru
      _
    // Predicated region
    $region26: #{tpu_custom_call.1} parent=1 // pred_check
      _
    $region27: #{tpu_custom_call.1} parent=1 // pred_check_branch
      %82 = sbr.rel (0) target = $region29
    $region28: #{tpu_custom_call.1} parent=1 // pred_region
      %84 = dma.done [#allocation4], 128
    $region29: #{tpu_custom_call.1} parent=1 // pred_fallthru
      _
    // Predicated region
    $region30: #{tpu_custom_call.1} parent=1 // pred_check
      _
    $region31: #{tpu_custom_call.1} parent=1 // pred_check_branch
      %86 = sbr.rel (0) target = $region33
    $region32: #{tpu_custom_call.1} parent=1 // pred_region
      %88 = dma.done [#allocation9], 128
    $region33: #{tpu_custom_call.1} parent=1 // pred_fallthru
      _
    %89 = vsyncpa [#allocation3], 1
    %90 = vsyncpa [#allocation6], 1
    %91 = vsyncpa [#allocation4], 1
    %92 = vsyncpa [#allocation9], 1

</llo_original>
